<compile_context>
chip_gen: v7x
topology: tpu7x:2x2x1
jax: 0.10.0
libtpu: 0.0.40
codegen_flags: <defaults>
</compile_context>

<pallas_src>
import jax
import jax.numpy as jnp
from jax.experimental import pallas as pl
from jax.experimental.pallas import tpu as pltpu

LANES = 128       # vreg lane width: keep the last dim lane-dense
SUBLANES = 8      # f32 sublane granularity
TILE_ROWS = 1024  # (1024, 128) f32 tile = 512 KiB per buffer


def affine_kernel(w_ref, b_ref, x_ref, o_ref):
    # w_ref / b_ref: (1, 1) f32 scalars in SMEM.  x_ref / o_ref: (tile_rows, 128) VMEM tiles.
    w = w_ref[0, 0]
    b = b_ref[0, 0]
    o_ref[...] = (x_ref[...].astype(jnp.float32) * w + b).astype(o_ref.dtype)


def linear11(x, w, b):
    """Applies y = x @ W^T + b for W of shape (1, 1), b of shape (1,)."""
    n, f = x.shape
    assert f == 1
    w_s = jnp.reshape(w, (1, 1)).astype(jnp.float32)
    b_s = jnp.reshape(b, (1, 1)).astype(jnp.float32)

    # Lane-dense layout: flatten to (rows, 128), then pad rows so the grid is
    # made of full tiles only (no masked partial stores on the last step).
    rows = pl.cdiv(n, LANES)
    if rows <= TILE_ROWS:
        tile_rows = ((rows + SUBLANES - 1) // SUBLANES) * SUBLANES
        rows_pad = tile_rows
    else:
        tile_rows = TILE_ROWS
        rows_pad = ((rows + TILE_ROWS - 1) // TILE_ROWS) * TILE_ROWS

    n_pad = rows_pad * LANES
    x_flat = jnp.reshape(x, (-1,))
    if n_pad != n:
        x_flat = jnp.pad(x_flat, (0, n_pad - n))
    x2 = jnp.reshape(x_flat, (rows_pad, LANES))

    grid = (rows_pad // tile_rows,)

    y2 = pl.pallas_call(
        affine_kernel,
        out_shape=jax.ShapeDtypeStruct((rows_pad, LANES), x.dtype),
        grid_spec=pl.GridSpec(
            grid=grid,
            in_specs=[
                pl.BlockSpec(memory_space=pltpu.SMEM),                # w (scalar)
                pl.BlockSpec(memory_space=pltpu.SMEM),                # b (scalar)
                pl.BlockSpec((tile_rows, LANES), lambda i: (i, 0)),   # x tile
            ],
            out_specs=pl.BlockSpec((tile_rows, LANES), lambda i: (i, 0)),
        ),
        compiler_params=pltpu.CompilerParams(
            dimension_semantics=("parallel",),  # batch axis: shard across TCs on v7x
        ),
    )(w_s, b_s, x2)

    # Drop the padded tail and restore the (N, 1) PyTorch layout.
    return jnp.reshape(jnp.reshape(y2, (-1,))[:n], (n, 1))


if __name__ == "__main__":
    key = jax.random.PRNGKey(0)
    kx, kw, kb = jax.random.split(key, 3)

    # PyTorch Linear(1, 1) parameters: weight (1, 1), bias (1,).
    w = jax.random.uniform(kw, (1, 1), jnp.float32, minval=-1.0, maxval=1.0)
    b = jax.random.uniform(kb, (1,), jnp.float32, minval=-1.0, maxval=1.0)

    fn = jax.jit(linear11)

    # Exercise: tiny (single padded tile), mid (single big tile), multi-tile grid.
    for n in (8, 3000, 200_000):
        x = jax.random.normal(kx, (n, 1), jnp.float32)
        y = fn(x, w, b)
        jax.block_until_ready(y)
        y_ref = x @ w.T + b
        assert y.shape == (n, 1)
        assert jnp.allclose(y, y_ref, atol=1e-5), f"mismatch vs reference at N={n}"

    print("KERNEL_OK")
</pallas_src>

<mosaic_0001>
module attributes {stable_mosaic.version = 11 : i64} {
  func.func @affine_kernel(%arg0: i32, %arg1: memref<1x1xf32, #tpu.memory_space<smem>>, %arg2: memref<1x1xf32, #tpu.memory_space<smem>>, %arg3: memref<8x128xf32, #tpu.memory_space<vmem>>, %arg4: memref<8x128xf32, #tpu.memory_space<vmem>>) attributes {dimension_semantics = [#tpu.dimension_semantics<parallel>], iteration_bounds = array<i64: 1>, scalar_prefetch = 0 : i64, scratch_operands = 0 : i64, tpu.core_type = #tpu.core_type<tc>, window_params = [{transform_indices = @transform_0, window_bounds = array<i64: 1, 1>}, {transform_indices = @transform_1, window_bounds = array<i64: 1, 1>}, {transform_indices = @transform_2, window_bounds = array<i64: 8, 128>}, {transform_indices = @transform_3, window_bounds = array<i64: 8, 128>}]} {
    %c0 = arith.constant 0 : index
    %c0_0 = arith.constant 0 : index
    %0 = memref.load %arg1[%c0, %c0_0] : memref<1x1xf32, #tpu.memory_space<smem>>
    %c0_1 = arith.constant 0 : index
    %c0_2 = arith.constant 0 : index
    %1 = memref.load %arg2[%c0_1, %c0_2] : memref<1x1xf32, #tpu.memory_space<smem>>
    %c0_3 = arith.constant 0 : index
    %c0_4 = arith.constant 0 : index
    %2 = vector.load %arg3[%c0_3, %c0_4] : memref<8x128xf32, #tpu.memory_space<vmem>>, vector<8x128xf32>
    %3 = vector.broadcast %0 : f32 to vector<8x128xf32>
    %4 = arith.mulf %2, %3 : vector<8x128xf32>
    %5 = vector.broadcast %1 : f32 to vector<8x128xf32>
    %6 = arith.addf %4, %5 : vector<8x128xf32>
    %c0_5 = arith.constant 0 : index
    %c0_6 = arith.constant 0 : index
    %7 = vector.load %arg4[%c0_5, %c0_6] : memref<8x128xf32, #tpu.memory_space<vmem>>, vector<8x128xf32>
    tpu.vector_store %arg4[%c0_5, %c0_6], %6 {strides = array<i32>} : memref<8x128xf32, #tpu.memory_space<vmem>>, vector<8x128xf32>,
    return
  }
  func.func @transform_0(%arg0: i32) -> (i32, i32) {
    %c0_i32 = arith.constant 0 : i32
    %c0_i32_0 = arith.constant 0 : i32
    %c0_i32_1 = arith.constant 0 : i32
    return %c0_i32, %c0_i32_0 : i32, i32
  }
  func.func @transform_1(%arg0: i32) -> (i32, i32) {
    %c0_i32 = arith.constant 0 : i32
    %c0_i32_0 = arith.constant 0 : i32
    %c0_i32_1 = arith.constant 0 : i32
    return %c0_i32, %c0_i32_0 : i32, i32
  }
  func.func @transform_2(%arg0: i32) -> (i32, i32) {
    %c0_i32 = arith.constant 0 : i32
    %c0_i32_0 = arith.constant 0 : i32
    return %arg0, %c0_i32 : i32, i32
  }
  func.func @transform_3(%arg0: i32) -> (i32, i32) {
    %c0_i32 = arith.constant 0 : i32
    %c0_i32_0 = arith.constant 0 : i32
    return %arg0, %c0_i32 : i32, i32
  }
}

</mosaic_0001>

<llo_original>
// kernel: linear11.1
$region0: #{linear11.1}
  #allocation0 [shape = 'u32[]', space=smem, size = 0x4, offset = 0x4, fixed_abs, tag = 'smem constant byte address 0x4 - core index']
  #allocation1 [shape = 'u32[144,128]{1,0:T(1,128)}', space=vmem, size = 0x12000, scoped, tag = 'internal scratch']
  #allocation2 [shape = 'f32[1,1]{1,0:T(1,128)S(6)}', space=smem, size = 0x200, scoped, tag = 'scoped memory for linear11.1']
  #allocation3 [shape = 'f32[1,1]{1,0:T(1,128)S(6)}', space=smem, size = 0x200, scoped, tag = 'scoped memory for linear11.1']
  %s0 = inlined_call_operand.<no memory space> [shape: f32[1,1], index: 0, kind: input, shape index: {}]
  %s1 = inlined_call_operand.<no memory space> [shape: f32[1,1], index: 1, kind: input, shape index: {}]
  %s2 = inlined_call_operand.vmem [shape: f32[8,128], index: 2, kind: input, shape index: {}]
  %s3 = inlined_call_operand.vmem [shape: f32[8,128], index: 3, kind: output, shape index: {}]
  %s4 = sld [smem:[#allocation0]]
  $region22: #{linear11.1} parent=0
    _
  %s6 = ssub.s32 1, %s4
  %s7 = scalar_select 0, %s6, %s4
  %8 = sst [smem:[#allocation2]] %s0
  %9 = sst [smem:[#allocation3]] %s1
  // Predicated region
  $region2: #{linear11.1} parent=0 // pred_check
    _
  $region3: #{linear11.1} parent=0 // pred_check_branch
    %11 = sbr.rel (0) target = $region5
  $region4: #{linear11.1} parent=0 // pred_region
    _
  $region5: #{linear11.1} parent=0 // pred_fallthru
    _
  // Predicated region
  $region6: #{linear11.1} parent=0 // pred_check
    _
  $region7: #{linear11.1} parent=0 // pred_check_branch
    %13 = sbr.rel (0) target = $region9
  $region8: #{linear11.1} parent=0 // pred_region
    _
  $region9: #{linear11.1} parent=0 // pred_fallthru
    _
  // Predicated region
  $region10: #{linear11.1} parent=0 // pred_check
    _
  $region11: #{linear11.1} parent=0 // pred_check_branch
    %15 = sbr.rel (0) target = $region13
  $region12: #{linear11.1} parent=0 // pred_region
    _
  $region13: #{linear11.1} parent=0 // pred_fallthru
    _
  %s16 = sld [smem:[#allocation2]]
  %s17 = sld [smem:[#allocation3]]
  %v18 = vld [vmem:[%s2] sm:$0xff]
  %v19 = vstv %s16
  %v20 = vmul.f32 %v18, %v19
  %v21 = vstv %s17
  %v22 = vadd.f32 %v20, %v21
  %23 = vst [vmem:[%s3] sm:$0xff] %v22
  // Predicated region
  $region14: #{linear11.1} parent=0 // pred_check
    _
  $region15: #{linear11.1} parent=0 // pred_check_branch
    %25 = sbr.rel (0) target = $region17
  $region16: #{linear11.1} parent=0 // pred_region
    _
  $region17: #{linear11.1} parent=0 // pred_fallthru
    _
  // Predicated region
  $region18: #{linear11.1} parent=0 // pred_check
    _
  $region19: #{linear11.1} parent=0 // pred_check_branch
    %27 = sbr.rel (0) target = $region21
  $region20: #{linear11.1} parent=0 // pred_region
    _
  $region21: #{linear11.1} parent=0 // pred_fallthru
    _

</llo_original>
